<compile_context>
chip_gen: v7x
topology: tpu7x:2x2x1
jax: 0.10.0
libtpu: 0.0.40
codegen_flags: <defaults>
</compile_context>

<pallas_src>
import jax
import jax.numpy as jnp
from jax.experimental import pallas as pl
from jax.experimental.pallas import tpu as pltpu


def _stem_kernel(w_ref, b_ref, p_ref, o_ref):
    # (O_pad, K_pad) x (K_pad, tm) on the MXU, f32 accumulation.  BN scale is
    # pre-folded into w_ref, so the epilogue is bias-add + SiLU in f32, then a
    # single cast at the (lane-dense, unmasked) bf16 store.
    acc = jnp.dot(w_ref[...], p_ref[0], preferred_element_type=jnp.float32)
    y = acc + b_ref[...]                       # (O_pad, tm) + (O_pad, 1) bias broadcast
    o_ref[0] = (y * jax.nn.sigmoid(y)).astype(o_ref.dtype)


def conv_bn_silu_pallas(x_nchw, w_oihw, scale, bias, *, stride=2, padding=1, tm=4096):
    """Fused stem conv(3x3,s2,p1) + folded BN + SiLU.  Returns NCHW bf16."""
    N, C, H, W = x_nchw.shape
    O, _, KH, KW = w_oihw.shape
    OH = (H + 2 * padding - KH) // stride + 1
    OW = (W + 2 * padding - KW) // stride + 1
    M_img = OH * OW                            # per-image output columns
    K = KH * KW * C

    O_pad = ((O + 31) // 32) * 32              # bf16 sublane tile is 16; use 32
    K_pad = ((K + 31) // 32) * 32

    # --- glue: bf16 pad + per-image im2col laid out as (N, K, M_img) ---
    x_bf = x_nchw.astype(jnp.bfloat16)
    xp = jnp.pad(x_bf, ((0, 0), (0, 0), (padding, padding), (padding, padding)))
    cols = []
    for kh in range(KH):
        for kw in range(KW):
            cols.append(xp[:, :, kh:kh + stride * OH:stride, kw:kw + stride * OW:stride])
    patches = jnp.stack(cols, axis=1)          # (N, KH*KW, C, OH, OW)
    patches = patches.reshape(N, K, M_img)     # k ordered (kh, kw, c)

    # weight (O, C, KH, KW) -> (O, K) with k ordered (kh, kw, c) to match the
    # stack order above; fold the eval-mode BN scale into the weight.
    w2 = jnp.transpose(w_oihw, (0, 2, 3, 1)).reshape(O, K)
    w2 = w2 * scale.reshape(O, 1)
    w2 = jnp.pad(w2, ((0, O_pad - O), (0, K_pad - K))).astype(jnp.bfloat16)
    b2 = jnp.pad(bias.reshape(O, 1), ((0, O_pad - O), (0, 0))).astype(jnp.float32)

    # --- tile M_img (the lane dim): tm is a multiple of 128, padded per image ---
    m128 = ((M_img + 127) // 128) * 128
    tm_eff = min(tm, m128)
    # Keep the total grid >= 2 steps (v7x has 2 TensorCores; "parallel" grid
    # axes only help if there is something to shard).  Batch usually covers
    # this; for N == 1 halve the m-tile when possible.
    if N * ((m128 + tm_eff - 1) // tm_eff) < 2 and m128 >= 256:
        tm_eff = (((m128 // 2) + 127) // 128) * 128
    m_pad = ((M_img + tm_eff - 1) // tm_eff) * tm_eff

    patches = jnp.pad(patches, ((0, 0), (0, K_pad - K), (0, m_pad - M_img)))
    grid = (N, m_pad // tm_eff)

    out = pl.pallas_call(
        _stem_kernel,
        out_shape=jax.ShapeDtypeStruct((N, O_pad, m_pad), jnp.bfloat16),
        grid_spec=pltpu.PrefetchScalarGridSpec(
            num_scalar_prefetch=0,
            grid=grid,
            in_specs=[
                pl.BlockSpec((O_pad, K_pad), lambda n, i: (0, 0)),       # folded weights (resident)
                pl.BlockSpec((O_pad, 1), lambda n, i: (0, 0)),           # BN bias (resident)
                pl.BlockSpec((1, K_pad, tm_eff), lambda n, i: (n, 0, i)),  # patch columns (streamed)
            ],
            # lane-dense bf16 store, already in (N, O, OH*OW) layout
            out_specs=pl.BlockSpec((1, O_pad, tm_eff), lambda n, i: (n, 0, i)),
        ),
        compiler_params=pltpu.CompilerParams(
            dimension_semantics=("parallel", "parallel")),
    )(w2, b2, patches)

    # (N, O_pad, m_pad) -> (N, O, OH, OW): slice off padding, free reshape
    # (no full-tensor transpose pass anymore).
    return out[:, :O, :M_img].reshape(N, O, OH, OW)


class EfficientNetV2:
    """Pallas port of the reference module."""

    def __init__(self, key):
        # efficientnet_v2_s stem params (deterministic synthetic init):
        # Conv2d(3, 24, kernel_size=3, stride=2, padding=1, bias=False)
        # BatchNorm2d(24, eps=1e-3) in eval mode (running stats folded).
        k1, k2, k3, k4, k5 = jax.random.split(key, 5)
        self.stem_w = jax.random.normal(k1, (24, 3, 3, 3), jnp.float32) * 0.1
        gamma = jax.random.uniform(k2, (24,), jnp.float32, 0.5, 1.5)
        beta = jax.random.normal(k3, (24,), jnp.float32) * 0.1
        mean = jax.random.normal(k4, (24,), jnp.float32) * 0.1
        var = jax.random.uniform(k5, (24,), jnp.float32, 0.5, 1.5)
        eps = 1e-3
        scale = gamma / jnp.sqrt(var + eps)
        self.bn_scale = scale                   # (24,)
        self.bn_bias = beta - mean * scale      # (24,)

    def forward(self, x):
        # Exact semantics of the reference module's forward: it returns None
        # and never invokes the constructed efficientnet_v2_s.
        # TODO(synk): reference forward() discards the model, so the remaining
        # efficientnet_v2_s stages (fused/MBConv blocks, head) are not ported.
        return None

    def stem_forward(self, x_nchw):
        # Pallas-kernel implementation of the model's stem (conv+BN+SiLU).
        return conv_bn_silu_pallas(x_nchw, self.stem_w, self.bn_scale, self.bn_bias)


def _stem_reference(x_nchw, w_oihw, scale, bias):
    """Plain-JAX f32 reference for correctness checking."""
    y = jax.lax.conv_general_dilated(
        x_nchw, w_oihw, window_strides=(2, 2), padding=((1, 1), (1, 1)),
        dimension_numbers=("NCHW", "OIHW", "NCHW"))
    s = scale.reshape(1, -1, 1, 1)
    b = bias.reshape(1, -1, 1, 1)
    y = y * s + b
    return y * jax.nn.sigmoid(y)


if __name__ == "__main__":
    key = jax.random.PRNGKey(0)
    k_model, k_x = jax.random.split(key)

    model = EfficientNetV2(k_model)

    # Small input consistent with the model: NCHW, 3 input channels.
    x = jax.random.normal(k_x, (2, 3, 16, 16), jnp.float32)

    # Exact forward semantics of the reference module:
    assert model.forward(x) is None

    # Run the Pallas stem kernel and validate against the plain-JAX reference.
    out = model.stem_forward(x)
    out = jax.block_until_ready(out)

    ref = _stem_reference(x, model.stem_w, model.bn_scale, model.bn_bias)
    ref = jax.block_until_ready(ref)

    assert out.shape == (2, 24, 8, 8), out.shape
    # Tolerance accounts for bf16 MXU operands and the bf16 output store;
    # accumulation and epilogue stay f32.
    err = jnp.max(jnp.abs(out.astype(jnp.float32) - ref))
    assert jnp.allclose(out.astype(jnp.float32), ref, atol=4e-2, rtol=4e-2), float(err)

    print("KERNEL_OK")
</pallas_src>

<mosaic_0001>
module attributes {stable_mosaic.version = 11 : i64} {
  func.func @_stem_kernel(%arg0: i32, %arg1: i32, %arg2: memref<32x32xbf16, #tpu.memory_space<vmem>>, %arg3: memref<32x1xf32, #tpu.memory_space<vmem>>, %arg4: memref<1x32x128xbf16, #tpu.memory_space<vmem>>, %arg5: memref<1x32x128xbf16, #tpu.memory_space<vmem>>) attributes {dimension_semantics = [#tpu.dimension_semantics<parallel>, #tpu.dimension_semantics<parallel>], iteration_bounds = array<i64: 2, 1>, scalar_prefetch = 0 : i64, scratch_operands = 0 : i64, tpu.core_type = #tpu.core_type<tc>, window_params = [{pipeline_mode = #tpu.pipeline_mode<synchronous>, transform_indices = @transform_0, window_bounds = array<i64: 32, 32>}, {pipeline_mode = #tpu.pipeline_mode<synchronous>, transform_indices = @transform_1, window_bounds = array<i64: 32, 1>}, {transform_indices = @transform_2, window_bounds = array<i64: 1, 32, 128>}, {transform_indices = @transform_3, window_bounds = array<i64: 1, 32, 128>}]} {
    %c0 = arith.constant 0 : index
    %c0_0 = arith.constant 0 : index
    %0 = vector.load %arg2[%c0, %c0_0] : memref<32x32xbf16, #tpu.memory_space<vmem>>, vector<32x32xbf16>
    %c0_1 = arith.constant 0 : index
    %c0_2 = arith.constant 0 : index
    %c0_3 = arith.constant 0 : index
    %1 = vector.load %arg4[%c0_1, %c0_2, %c0_3] : memref<1x32x128xbf16, #tpu.memory_space<vmem>>, vector<1x32x128xbf16>
    %2 = vector.shape_cast %1 : vector<1x32x128xbf16> to vector<32x128xbf16>
    %cst = arith.constant dense<0.000000e+00> : vector<32x128xf32>
    %3 = tpu.matmul %0, %2, %cst {dimension_numbers = #tpu.dot_dimension_numbers<[1], [0], [0], [1], [0, 0, 1, 1], [], []>} : vector<32x32xbf16>, vector<32x128xbf16>, vector<32x128xf32> -> vector<32x128xf32>
    %c0_4 = arith.constant 0 : index
    %c0_5 = arith.constant 0 : index
    %4 = vector.load %arg3[%c0_4, %c0_5] : memref<32x1xf32, #tpu.memory_space<vmem>>, vector<32x1xf32>
    %5 = vector.broadcast %4 : vector<32x1xf32> to vector<32x128xf32>
    %6 = arith.addf %3, %5 : vector<32x128xf32>
    %7 = arith.negf %6 : vector<32x128xf32>
    %8 = math.exp %7 : vector<32x128xf32>
    %cst_6 = arith.constant 1.000000e+00 : f32
    %9 = vector.broadcast %cst_6 : f32 to vector<32x128xf32>
    %10 = arith.addf %9, %8 : vector<32x128xf32>
    %11 = arith.divf %9, %10 : vector<32x128xf32>
    %12 = arith.mulf %6, %11 : vector<32x128xf32>
    %13 = arith.truncf %12 : vector<32x128xf32> to vector<32x128xbf16>
    %c0_7 = arith.constant 0 : index
    %c0_8 = arith.constant 0 : index
    %c0_9 = arith.constant 0 : index
    %14 = vector.load %arg5[%c0_7, %c0_8, %c0_9] : memref<1x32x128xbf16, #tpu.memory_space<vmem>>, vector<1x32x128xbf16>
    %15 = vector.shape_cast %14 : vector<1x32x128xbf16> to vector<32x128xbf16>
    %16 = vector.shape_cast %13 : vector<32x128xbf16> to vector<1x32x128xbf16>
    tpu.vector_store %arg5[%c0_7, %c0_8, %c0_9], %16 {strides = array<i32>} : memref<1x32x128xbf16, #tpu.memory_space<vmem>>, vector<1x32x128xbf16>,
    return
  }
  func.func @transform_0(%arg0: i32, %arg1: i32) -> (i32, i32) {
    %c0_i32 = arith.constant 0 : i32
    %c0_i32_0 = arith.constant 0 : i32
    %c0_i32_1 = arith.constant 0 : i32
    return %c0_i32, %c0_i32_0 : i32, i32
  }
  func.func @transform_1(%arg0: i32, %arg1: i32) -> (i32, i32) {
    %c0_i32 = arith.constant 0 : i32
    %c0_i32_0 = arith.constant 0 : i32
    %c0_i32_1 = arith.constant 0 : i32
    return %c0_i32, %c0_i32_0 : i32, i32
  }
  func.func @transform_2(%arg0: i32, %arg1: i32) -> (i32, i32, i32) {
    %c0_i32 = arith.constant 0 : i32
    %c0_i32_0 = arith.constant 0 : i32
    return %arg0, %c0_i32, %arg1 : i32, i32, i32
  }
  func.func @transform_3(%arg0: i32, %arg1: i32) -> (i32, i32, i32) {
    %c0_i32 = arith.constant 0 : i32
    %c0_i32_0 = arith.constant 0 : i32
    return %arg0, %c0_i32, %arg1 : i32, i32, i32
  }
}

</mosaic_0001>

<llo_original>
// kernel: tpu_custom_call.1
$region0: #{tpu_custom_call.1}
  #allocation0 [shape = 'u32[]', space=smem, size = 0x4, offset = 0x4, fixed_abs, tag = 'smem constant byte address 0x4 - core index']
  #allocation1 [shape = 'u32[144,128]{1,0:T(1,128)}', space=vmem, size = 0x12000, scoped, tag = 'internal scratch']
  %s0 = inlined_call_operand.hbm [shape: bf16[32,32], index: 0, kind: input, shape index: {}]
  %s1 = inlined_call_operand.vmem [shape: f32[32,1], index: 1, kind: input, shape index: {}]
  %s2 = inlined_call_operand.vmem [shape: bf16[2,32,128], index: 2, kind: input, shape index: {}]
  %s3 = inlined_call_operand.hbm [shape: bf16[2,32,128], index: 3, kind: output, shape index: {}]
  %s4 = sld [smem:[#allocation0]]
  $region49: #{tpu_custom_call.1} parent=0
    _
  %s6 = ssub.s32 1, %s4
  %s7 = scalar_select 0, %s6, %s4
  $region1: #{tpu_custom_call.1} parent=0
    #allocation2 [shape = 'u8[8192]{0}', space=vmem, size = 0x2000, scoped, tag = 'input window, operand 0, single buffered']
    #allocation3 [shape = 's32[2]{0}', space=sflag, size = 0x8, scoped, tag = 'scoped memory for tpu_custom_call.1']
    #allocation4 [shape = 's32[2]{0}', space=sflag, size = 0x8, scoped, tag = 'scoped memory for tpu_custom_call.1']
    #allocation5 [shape = 'u8[16384]{0}', space=vmem, size = 0x4000, scoped, tag = 'output window, operand 0']
    %8 = vsyncpa [#allocation3], 0
    %9 = vsyncpa [#allocation4], 0
    %s10 = scalar_lea.sflag [#allocation4], 1
    %11 = vsyncpa %s10, 0
    loop: start=0, step=1, limit=4
    $region2: #{tpu_custom_call.1} parent=1 // loop_pre_header
      _
    $region3: #{tpu_custom_call.1} parent=1 // loop_header
      %s13 = sphi 0, %s17
      %p14 = scmp.ge.s32.totalorder %s13, 4
      %s20 = sphi 0, %s32
      %s21 = sphi 0, %s28
      %s22 = sphi 0, %s20
      %s23 = sphi 0, %s21
      %s24 = sphi 0, %s22
      %s25 = sphi 0, %s23
      %s33 = sphi 0, %s33
      %s35 = sphi 0, %s33
      %s36 = sphi 0, %s35
      %s50 = sphi 0, %s36
      %s54 = sphi 0, %s54
      %s56 = sphi 0, %s54
      %s57 = sphi 0, %s56
      %s71 = sphi 0, %s57
      %s79 = sphi 0, %s81
      %s82 = sphi 0, %s79
      %s83 = sphi 0, %s82
      %s99 = sphi 0, %s83
      %s107 = sphi 0, %s109
      %s110 = sphi 0, %s107
      %s111 = sphi 0, %s110
      %s127 = sphi 0, %s111
    $region4: #{tpu_custom_call.1} parent=1 // loop_header_branch
      %16 = sbr.rel (%p14) target = $region8
    $region5: #{tpu_custom_call.1} parent=1 // loop_body
      %s18 = ssub.s32 %s13, 1
      %s19 = ssub.s32 %s13, 2
      %s26 = sadd.s32 1, %s21
      %p27 = scmp.ge.s32.totalorder %s26, 1
      %s28 = scalar_select %p27, 0, %s26
      %s29 = sadd.s32 1, %s20
      %s30 = scalar_select %p27, %s29, %s20
      %p31 = scmp.ge.s32.totalorder %s30, 2
      %s32 = scalar_select %p31, 0, %s30
      %s34 = sadd.s32 %s33, 1
      %p37 = scmp.eq.s32.totalorder %s13, 1
      %p38 = scmp.ne.s32.totalorder %s33, %s35
      %p39 = scmp.eq.s32.totalorder %s13, 0
      %p40 = por %p38, %p39
      %p41 = scmp.ne.s32.totalorder %s33, %s35
      %p42 = scmp.eq.s32.totalorder %s18, 1
      %p43 = por %p41, %p42
      %p44 = scmp.ne.s32.totalorder %s35, %s36
      %p45 = scmp.eq.s32.totalorder %s18, 0
      %p46 = por %p44, %p45
      %p47 = scmp.ne.s32.totalorder %s35, %s36
      %p48 = scmp.eq.s32.totalorder %s19, 1
      %p49 = por %p47, %p48
      %p51 = scmp.ne.s32.totalorder %s36, %s50
      %p52 = scmp.eq.s32.totalorder %s19, 0
      %p53 = por %p51, %p52
      %s55 = sadd.s32 %s54, 1
      %p58 = scmp.eq.s32.totalorder %s13, 1
      %p59 = scmp.ne.s32.totalorder %s54, %s56
      %p60 = scmp.eq.s32.totalorder %s13, 0
      %p61 = por %p59, %p60
      %p62 = scmp.ne.s32.totalorder %s54, %s56
      %p63 = scmp.eq.s32.totalorder %s18, 1
      %p64 = por %p62, %p63
      %p65 = scmp.ne.s32.totalorder %s56, %s57
      %p66 = scmp.eq.s32.totalorder %s18, 0
      %p67 = por %p65, %p66
      %p68 = scmp.ne.s32.totalorder %s56, %s57
      %p69 = scmp.eq.s32.totalorder %s19, 1
      %p70 = por %p68, %p69
      %p72 = scmp.ne.s32.totalorder %s57, %s71
      %p73 = scmp.eq.s32.totalorder %s19, 0
      %p74 = por %p72, %p73
      %s75 = ssub.s32 %s20, %s32
      %s76 = ssub.s32 %s21, %s28
      %s77 = sor.u32 %s75, %s76
      %p78 = scmp.eq.s32.totalorder %s77, 0
      %s80 = sadd.s32 %s79, 1
      %s81 = scalar_select %p78, %s79, %s80
      %p84 = pneg %p78
      %p85 = scmp.eq.s32.totalorder %s13, 1
      %p86 = por %p84, %p85
      %p87 = scmp.ne.s32.totalorder %s79, %s82
      %p88 = scmp.eq.s32.totalorder %s13, 0
      %p89 = por %p87, %p88
      %p90 = scmp.ne.s32.totalorder %s79, %s82
      %p91 = scmp.eq.s32.totalorder %s18, 1
      %p92 = por %p90, %p91
      %p93 = scmp.ne.s32.totalorder %s82, %s83
      %p94 = scmp.eq.s32.totalorder %s18, 0
      %p95 = por %p93, %p94
      %p96 = scmp.ne.s32.totalorder %s82, %s83
      %p97 = scmp.eq.s32.totalorder %s19, 1
      %p98 = por %p96, %p97
      %p100 = scmp.ne.s32.totalorder %s83, %s99
      %p101 = scmp.eq.s32.totalorder %s19, 0
      %p102 = por %p100, %p101
      %s103 = ssub.s32 %s20, %s32
      %s104 = ssub.s32 %s21, %s28
      %s105 = sor.u32 %s103, %s104
      %p106 = scmp.eq.s32.totalorder %s105, 0
      %s108 = sadd.s32 %s107, 1
      %s109 = scalar_select %p106, %s107, %s108
      %p112 = pneg %p106
      %p113 = scmp.eq.s32.totalorder %s13, 1
      %p114 = por %p112, %p113
      %p115 = scmp.ne.s32.totalorder %s107, %s110
      %p116 = scmp.eq.s32.totalorder %s13, 0
      %p117 = por %p115, %p116
      %p118 = scmp.ne.s32.totalorder %s107, %s110
      %p119 = scmp.eq.s32.totalorder %s18, 1
      %p120 = por %p118, %p119
      %p121 = scmp.ne.s32.totalorder %s110, %s111
      %p122 = scmp.eq.s32.totalorder %s18, 0
      %p123 = por %p121, %p122
      %p124 = scmp.ne.s32.totalorder %s110, %s111
      %p125 = scmp.eq.s32.totalorder %s19, 1
      %p126 = por %p124, %p125
      %p128 = scmp.ne.s32.totalorder %s111, %s127
      %p129 = scmp.eq.s32.totalorder %s19, 0
      %p130 = por %p128, %p129
      %p131 = scmp.le.s32.totalorder 1, %s13
      %p132 = scmp.lt.s32.totalorder %s13, 3
      %p133 = pnand %p131, %p132
      %p134 = pneg %p133
      // Predicated region
      $region9: #{tpu_custom_call.1} parent=5 // pred_check
        _
      $region10: #{tpu_custom_call.1} parent=5 // pred_check_branch
        %136 = sbr.rel (%p133) target = $region12
      $region11: #{tpu_custom_call.1} parent=5 // pred_region
        %s137 = ssub.s32 %s13, 1
        // Predicated region
        $region13: #{tpu_custom_call.1} parent=11 // pred_check
          %p138 = pneg %p46
        $region14: #{tpu_custom_call.1} parent=11 // pred_check_branch
          %140 = sbr.rel (%p138) target = $region16
        $region15: #{tpu_custom_call.1} parent=11 // pred_region
          %s142 = ssub.s32 256, 256
          %143 = vsyncadd [#allocation3], %s142
          %s144 = sshll.u32 [#allocation2], 4
          %s145 = int_to_ptr.vmem [resolvable:$true] %s144
          %150 = dma.hbm_to_vmem [thread:$0]  %s0, 256, %s145, [#allocation3], 64, 64, 4
        $region16: #{tpu_custom_call.1} parent=11 // pred_fallthru
          _
        // Predicated region
        $region17: #{tpu_custom_call.1} parent=11 // pred_check
          %p151 = pneg %p67
        $region18: #{tpu_custom_call.1} parent=11 // pred_check_branch
          %153 = sbr.rel (%p151) target = $region20
        $region19: #{tpu_custom_call.1} parent=11 // pred_region
          _
        $region20: #{tpu_custom_call.1} parent=11 // pred_fallthru
          _
      $region12: #{tpu_custom_call.1} parent=5 // pred_fallthru
        _
      %p154 = scmp.lt.s32.totalorder %s13, 2
      // Predicated region
      $region21: #{tpu_custom_call.1} parent=5 // pred_check
        %p155 = pneg %p154
      $region22: #{tpu_custom_call.1} parent=5 // pred_check_branch
        %157 = sbr.rel (%p155) target = $region24
      $region23: #{tpu_custom_call.1} parent=5 // pred_region
        // Predicated region
        $region25: #{tpu_custom_call.1} parent=23 // pred_check
          %p158 = pneg %p89
        $region26: #{tpu_custom_call.1} parent=23 // pred_check_branch
          %160 = sbr.rel (%p158) target = $region28
        $region27: #{tpu_custom_call.1} parent=23 // pred_region
          %p161 = scmp.lt.s32.totalorder %s20, 1
          %s162 = scalar_select %p161, %s20, 1
          %p163 = scmp.lt.s32.totalorder %s21, 0
          %s164 = scalar_select %p163, %s21, 0
          %s165 = smul.addr %s162, 4
          %s166 = sadd.s32 %s164, %s165
          %s167 = smul.addr %s166, 4
          %s168 = scalar_lea.vmem %s2, %s167
        $region28: #{tpu_custom_call.1} parent=23 // pred_fallthru
          _
      $region24: #{tpu_custom_call.1} parent=5 // pred_fallthru
        _
      %p169 = scmp.le.s32.totalorder 1, %s13
      %p170 = scmp.lt.s32.totalorder %s13, 3
      %p171 = pnand %p169, %p170
      %p172 = pneg %p171
      // Predicated region
      $region29: #{tpu_custom_call.1} parent=5 // pred_check
        _
      $region30: #{tpu_custom_call.1} parent=5 // pred_check_branch
        %174 = sbr.rel (%p171) target = $region32
      $region31: #{tpu_custom_call.1} parent=5 // pred_region
        %s175 = ssub.s32 %s13, 1
        // Predicated region
        $region33: #{tpu_custom_call.1} parent=31 // pred_check
          %p176 = pneg %p46
        $region34: #{tpu_custom_call.1} parent=31 // pred_check_branch
          %178 = sbr.rel (%p176) target = $region36
        $region35: #{tpu_custom_call.1} parent=31 // pred_region
          %179 = dma.done [#allocation3], 256
        $region36: #{tpu_custom_call.1} parent=31 // pred_fallthru
          _
        %p180 = pneg %p46
        %p181 = pneg %p43
        %p182 = pneg %p67
        %p183 = pneg %p64
        %p184 = scmp.lt.s32.totalorder %s22, 1
        %s185 = scalar_select %p184, %s22, 1
        %p186 = scmp.lt.s32.totalorder %s23, 0
        %s187 = scalar_select %p186, %s23, 0
        %s188 = smul.addr %s185, 4
        %s189 = sadd.s32 %s187, %s188
        %s190 = smul.addr %s189, 4
        %s191 = scalar_lea.vmem %s2, %s190
        %p192 = pneg %p95
        %p193 = pneg %p92
        %p194 = pneg %p123
        %p195 = pneg %p120
        %s196 = sand.u32 %s110, 1
        %s197 = scalar_lea.sflag [#allocation4], %s196
        %s198 = sand.u32 %s110, 1
        %s199 = smul.addr %s198, 16
        %s200 = scalar_lea.vmem [#allocation5], %s199
        %p201 = scmp.lt.s32.totalorder %s22, 1
        %s202 = scalar_select %p201, %s22, 1
        %p203 = scmp.lt.s32.totalorder %s23, 0
        %s204 = scalar_select %p203, %s23, 0
        %s205 = smul.addr %s202, 4
        %s206 = sadd.s32 %s204, %s205
        %s207 = smul.addr %s206, 4
        %s208 = scalar_lea.vmem %s2, %s207
        %v210 = vld [vmem:[#allocation2] sm:$0xf]
        %v211 = vld [vmem:[#allocation2 + $0x4] sm:$0xf]
        %v212 = vld [vmem:[#allocation2 + $0x8] sm:$0xf]
        %v213 = vld [vmem:[#allocation2 + $0xc] sm:$0xf]
        %v214 = vld [vmem:[%s208] sm:$0xf]
        %v215 = vld [vmem:[%s208 + $0x4] sm:$0xf]
        %v216 = vld [vmem:[%s208 + $0x8] sm:$0xf]
        %v217 = vld [vmem:[%s208 + $0xc] sm:$0xf]
        %v218 = vld [vmem:[%s1] sm:$0xff]
        %v219 = vld [vmem:[%s1 + $0x8] sm:$0xff]
        %v220 = vld [vmem:[%s1 + $0x10] sm:$0xff]
        %v221 = vld [vmem:[%s1 + $0x18] sm:$0xff]
        %223 = vset.pattern.permute.xlu0 0
        %224 = vperm.xlu0 %223, %v218
        %v225 = vpop.permute.xlu0 %224
        %228 = vset.pattern.permute.xlu0 0
        %229 = vperm.xlu0 %228, %v219
        %v230 = vpop.permute.xlu0 %229
        %233 = vset.pattern.permute.xlu0 0
        %234 = vperm.xlu0 %233, %v220
        %v235 = vpop.permute.xlu0 %234
        %238 = vset.pattern.permute.xlu0 0
        %239 = vperm.xlu0 %238, %v221
        %v240 = vpop.permute.xlu0 %239
        %v246 = vunpack.c.l.b16 %v210
        %v247 = vunpack.c.l.b16 %v211
        %v248 = vunpack.c.l.b16 %v212
        %v249 = vunpack.c.l.b16 %v213
        %v250 = vpack.c.b16 %v247, %v246
        %v251 = vpack.c.b16 %v249, %v248
        %v256 = vunpack.c.l.b16 %v214
        %v257 = vunpack.c.l.b16 %v215
        %v258 = vunpack.c.l.b16 %v216
        %v259 = vunpack.c.l.b16 %v217
        %v260 = vpack.c.b16 %v257, %v256
        %v261 = vpack.c.b16 %v259, %v258
        %vm264 = vcmask 261120
        %v266 = vsel %vm264, %v250, 0
        %v269 = vsel %vm264, %v251, 0
        %271 = vmatprep.subr.bf16.mxu0 0
        %272 = vmatpush1.bf16.msra.mxu0 %v260
        %273 = vmatprep.subr.bf16.mxu0 0
        %274 = vmatpush1.bf16.msra.mxu0 %v261
        %275 = vmatprep.subr.bf16.mxu0 0
        %276 = vmatpush1.bf16.msra.mxu0 0
        %277 = vmatprep.subr.bf16.mxu0 0
        %278 = vmatpush1.bf16.msra.mxu0 0
        %279 = vmatprep.subr.bf16.mxu0 0
        %280 = vmatpush1.bf16.msra.mxu0 0
        %281 = vmatprep.subr.bf16.mxu0 0
        %282 = vmatpush1.bf16.msra.mxu0 0
        %283 = vmatprep.subr.bf16.mxu0 0
        %284 = vmatpush1.bf16.msra.mxu0 0
        %285 = vmatprep.subr.bf16.mxu0 0
        %286 = vmatpush1.bf16.msra.mxu0 0
        %287 = vmatprep.subr.bf16.mxu0 0
        %288 = vmatpush1.bf16.msra.mxu0 0
        %289 = vmatprep.subr.bf16.mxu0 0
        %290 = vmatpush1.bf16.msra.mxu0 0
        %291 = vmatprep.subr.bf16.mxu0 0
        %292 = vmatpush1.bf16.msra.mxu0 0
        %293 = vmatprep.subr.bf16.mxu0 0
        %294 = vmatpush1.bf16.msra.mxu0 0
        %295 = vmatprep.subr.bf16.mxu0 0
        %296 = vmatpush1.bf16.msra.mxu0 0
        %297 = vmatprep.subr.bf16.mxu0 0
        %298 = vmatpush1.bf16.msra.mxu0 0
        %299 = vmatprep.subr.bf16.mxu0 0
        %300 = vmatpush1.bf16.msra.mxu0 0
        %301 = vmatprep.subr.bf16.mxu0 0
        %302 = vmatpush1.bf16.msra.mxu0 0
        %303 = vmatprep.mubr.bf16.mxu0 0
        %304 = vmatmul.mubr.bf16.gmra.mrb[0].mxu0 %v266
        %v305 = vpop.f32.mrb[0].mxu0
        %v306 = vadd.f32 %v225, %v305
        %v307 = vpop.f32.mrb[0].mxu0
        %v308 = vpop.f32.mrb[0].mxu0
        %v309 = vadd.f32 %v230, %v308
        %v310 = vpop.f32.mrb[0].mxu0
        %311 = vmatprep.mubr.bf16.mxu0 0
        %312 = vmatmul.mubr.bf16.gmra.mrb[0].mxu0 %v269
        %v313 = vpop.f32.mrb[0].mxu0
        %v314 = vadd.f32 %v235, %v313
        %v315 = vpop.f32.mrb[0].mxu0
        %v316 = vpop.f32.mrb[0].mxu0
        %v317 = vadd.f32 %v240, %v316
        %v318 = vpop.f32.mrb[0].mxu0
        %319 = vdwg.mxu0
        %v320 = vxor.u32 %v306, 2147483648
        %v321 = vxor.u32 %v309, 2147483648
        %v322 = vxor.u32 %v314, 2147483648
        %v323 = vxor.u32 %v317, 2147483648
        %v324 = vmul.f32 %v320, 1.442695
        %v325 = vpow.pop %v324
        %v326 = vmul.f32 %v321, 1.442695
        %v327 = vpow.pop %v326
        %v328 = vmul.f32 %v322, 1.442695
        %v329 = vpow.pop %v328
        %v330 = vmul.f32 %v323, 1.442695
        %v331 = vpow.pop %v330
        %v332 = vadd.f32 %v325, 1.0
        %v333 = vadd.f32 %v327, 1.0
        %v334 = vadd.f32 %v329, 1.0
        %v335 = vadd.f32 %v331, 1.0
        %v336 = vrcp.pop %v332
        %v337 = vmul.f32 1.0, %v336
        %v338 = vrcp.pop %v333
        %v339 = vmul.f32 1.0, %v338
        %v340 = vrcp.pop %v334
        %v341 = vmul.f32 1.0, %v340
        %v342 = vrcp.pop %v335
        %v343 = vmul.f32 1.0, %v342
        %v344 = vmul.f32 %v306, %v337
        %v345 = vmul.f32 %v309, %v339
        %v346 = vmul.f32 %v314, %v341
        %v347 = vmul.f32 %v317, %v343
        %v348 = vpack.c.bf16 %v345, %v344
        %v349 = vpack.c.bf16 %v347, %v346
        %v352 = vunpack.c.l.b16 %v348
        %v353 = vunpack.c.h.b16 %v348
        %v354 = vunpack.c.l.b16 %v349
        %v355 = vunpack.c.h.b16 %v349
        %v356 = vpack.c.b16 %v352, %v352
        %v357 = vpack.c.b16 %v353, %v353
        %v358 = vpack.c.b16 %v354, %v354
        %v359 = vpack.c.b16 %v355, %v355
        %364 = vst [vmem:[%s200] sm:$0xf] %v356
        %365 = vst [vmem:[%s200 + $0x4] sm:$0xf] %v357
        %366 = vst [vmem:[%s200 + $0x8] sm:$0xf] %v358
        %367 = vst [vmem:[%s200 + $0xc] sm:$0xf] %v359
        %s368 = sand.u32 %s110, 1
        %s369 = scalar_lea.sflag [#allocation4], %s368
        %s370 = sand.u32 %s110, 1
        %s371 = smul.addr %s370, 16
        %s372 = scalar_lea.vmem [#allocation5], %s371
        // Predicated region
        $region37: #{tpu_custom_call.1} parent=31 // pred_check
          %p373 = pneg %p120
        $region38: #{tpu_custom_call.1} parent=31 // pred_check_branch
          %375 = sbr.rel (%p373) target = $region40
        $region39: #{tpu_custom_call.1} parent=31 // pred_region
          %s377 = ssub.s32 256, 256
          %378 = vsyncadd %s369, %s377
          %s379 = smul.addr %s22, 4
          %s380 = sadd.s32 %s23, %s379
          %s381 = smul.addr %s380, 64
          %s382 = scalar_lea.hbm %s3, %s381
          %s383 = sshll.u32 %s372, 4
          %s384 = int_to_ptr.vmem [resolvable:$true] %s383
          %389 = dma.vmem_to_hbm [thread:$0]  %s384, 256, %s382, %s369, 64, 64, 4
        $region40: #{tpu_custom_call.1} parent=31 // pred_fallthru
          _
      $region32: #{tpu_custom_call.1} parent=5 // pred_fallthru
        _
      %p390 = scmp.le.s32.totalorder 2, %s13
      // Predicated region
      $region41: #{tpu_custom_call.1} parent=5 // pred_check
        %p391 = pneg %p390
      $region42: #{tpu_custom_call.1} parent=5 // pred_check_branch
        %393 = sbr.rel (%p391) target = $region44
      $region43: #{tpu_custom_call.1} parent=5 // pred_region
        %s394 = ssub.s32 %s13, 2
        // Predicated region
        $region45: #{tpu_custom_call.1} parent=43 // pred_check
          %p395 = pneg %p126
        $region46: #{tpu_custom_call.1} parent=43 // pred_check_branch
          %397 = sbr.rel (%p395) target = $region48
        $region47: #{tpu_custom_call.1} parent=43 // pred_region
          %s398 = sand.u32 %s111, 1
          %s399 = scalar_lea.sflag [#allocation4], %s398
          %s400 = sand.u32 %s111, 1
          %s401 = smul.addr %s400, 16
          %s402 = scalar_lea.vmem [#allocation5], %s401
          %403 = dma.done %s399, 256
        $region48: #{tpu_custom_call.1} parent=43 // pred_fallthru
          _
      $region44: #{tpu_custom_call.1} parent=5 // pred_fallthru
        _
    $region6: #{tpu_custom_call.1} parent=1 // loop_footer
      %s17 = sadd.s32 1, %s13
    $region7: #{tpu_custom_call.1} parent=1 // loop_footer_branch
      %12 = sbr.rel target = $region3
    $region8: #{tpu_custom_call.1} parent=1 // loop_exit
      _
    %404 = vsyncpa [#allocation3], 1
    %s405 = scalar_lea.sflag [#allocation3], 1
    %406 = vsyncpa %s405, 1
    %407 = vsyncpa [#allocation4], 1
    %s408 = scalar_lea.sflag [#allocation4], 1
    %409 = vsyncpa %s408, 1

</llo_original>
